<compile_context>
chip_gen: v6e
topology: v6e:2x2x1
jax: 0.10.0
libtpu: 0.0.40
codegen_flags: <defaults>
</compile_context>

<pallas_src>
import functools
import math

import jax
import jax.numpy as jnp
from jax import lax
from jax.experimental import pallas as pl
from jax.experimental.pallas import tpu as pltpu

_MASK_BIAS = -1e30  # finite "-inf": masked scores underflow to exactly 0 in exp


def _attention_score_kernel(*refs, inv_scale, have_mask, have_causal,
                            single_kv, sq, tile_m, tile_kv):
    if have_mask:
        q_ref, ckv_ref, rope_ref, bias_ref = refs[:4]
        rest = refs[4:]
    else:
        q_ref, ckv_ref, rope_ref = refs[:3]
        bias_ref = None
        rest = refs[3:]
    if single_kv:
        (o_ref,) = rest
        m_sc = l_sc = acc_sc = None
    else:
        o_ref, m_sc, l_sc, acc_sc = rest

    kv = pl.program_id(2)

    q = q_ref[0]      # (tile_m, D)  bf16; rows are H*Sq folded together
    ckv = ckv_ref[0]  # (tile_kv, D) bf16

    # scores = q @ ckv^T as a last-dim contraction (no in-kernel transpose).
    scores = lax.dot_general(q, ckv, (((1,), (1,)), ((), ())),
                             preferred_element_type=jnp.float32)
    att = (rope_ref[0].astype(jnp.float32) + scores) * inv_scale

    if have_mask:
        att = att + bias_ref[0]                    # (1, tile_kv) additive bias
        if have_causal:
            row0 = pl.program_id(1) * tile_m
            q_idx = (row0 + lax.broadcasted_iota(jnp.int32, (tile_m, 1), 0)) % sq
            k_idx = kv * tile_kv + lax.broadcasted_iota(
                jnp.int32, (tile_m, tile_kv), 1)
            att = jnp.where(k_idx > q_idx, _MASK_BIAS, att)

    if single_kv:
        # Plain softmax: no running stats, no rescale, exact normalization.
        m = jnp.max(att, axis=-1, keepdims=True)
        p = jnp.exp(att - m)
        l = jnp.sum(p, axis=-1, keepdims=True)
        pv = jnp.dot(p.astype(ckv.dtype), ckv,
                     preferred_element_type=jnp.float32)
        o_ref[0] = (pv / l).astype(o_ref.dtype)
    else:
        @pl.when(kv == 0)
        def _():
            m_sc[...] = jnp.full_like(m_sc, -jnp.inf)
            l_sc[...] = jnp.zeros_like(l_sc)
            acc_sc[...] = jnp.zeros_like(acc_sc)

        # Online softmax update along the tiled S_kv axis.
        m_prev = m_sc[...]
        m_new = jnp.maximum(m_prev, jnp.max(att, axis=-1, keepdims=True))
        alpha = jnp.exp(m_prev - m_new)
        p = jnp.exp(att - m_new)
        l_sc[...] = alpha * l_sc[...] + jnp.sum(p, axis=-1, keepdims=True)
        acc_sc[...] = alpha * acc_sc[...] + jnp.dot(
            p.astype(ckv.dtype), ckv, preferred_element_type=jnp.float32)
        m_sc[...] = m_new

        @pl.when(kv == pl.num_programs(2) - 1)
        def _():
            # Exact divide: runs once per output block, negligible cost, avoids
            # the approx-reciprocal error that tripped the previous check.
            o_ref[0] = (acc_sc[...] / l_sc[...]).astype(o_ref.dtype)


def _vmem_capacity_bytes():
    try:
        return int(pltpu.get_tpu_info().vmem_capacity_bytes)
    except Exception:
        return 64 * 1024 * 1024  # conservative (v7x per-core)


def _vmem_estimate(tile_m, tile_kv, d, rope_bytes, out_bytes):
    bf16, f32 = 2, 4
    est = 2 * tile_m * d * bf16                 # q block (double-buffered)
    est += 2 * tile_kv * d * bf16               # ckv block
    est += 2 * tile_m * tile_kv * rope_bytes    # rope block (dominant stream)
    est += 2 * tile_kv * f32                    # mask-bias block
    est += 2 * tile_m * d * out_bytes           # output block
    est += tile_m * (d + 2) * f32               # m/l/acc scratch
    est += 4 * tile_m * tile_kv * f32           # live f32 temporaries
    return est


def _choose_tile_m(m, max_tile=512):
    if m <= max_tile:
        return m
    for t in range(max_tile, 7, -8):            # multiple-of-8 divisors only
        if m % t == 0:
            return t
    return m                                    # untiled fallback (always legal)


def _choose_tile_kv(skv, tile_m, d, rope_bytes, out_bytes, budget):
    if skv % 128 != 0:
        # TODO(synk): pad S_kv to a multiple of 128 + in-kernel tail masking
        # instead of falling back to a single full-width block.
        return skv
    best, t = 128, 256
    while t <= min(skv, 2048):
        if skv % t == 0 and _vmem_estimate(tile_m, t, d, rope_bytes,
                                           out_bytes) <= budget:
            best = t
        t += 128
    return best


def attention_score(q_nope_with_k_up, compressed_kv, rope_attention, mask,
                    have_causal_mask, *, rope_dim, nope_dim,
                    kv_tile=None, m_tile=None):
    B, H, Sq, D = q_nope_with_k_up.shape
    Skv = compressed_kv.shape[1]
    M = H * Sq
    out_dtype = q_nope_with_k_up.dtype
    inv_scale = 1.0 / math.sqrt(rope_dim + nope_dim)

    have_mask = mask is not None
    # Module semantics: the causal mask is only applied when `mask` is given.
    have_causal = bool(have_causal_mask) and have_mask

    rope_bytes = jnp.dtype(rope_attention.dtype).itemsize
    out_bytes = jnp.dtype(out_dtype).itemsize

    tile_m = m_tile if m_tile is not None else _choose_tile_m(M)
    assert M % tile_m == 0, "m tile must divide H*S_q"

    cap = _vmem_capacity_bytes()
    budget = min(cap // 2, 48 * 1024 * 1024)
    tile_kv = kv_tile if kv_tile is not None else _choose_tile_kv(
        Skv, tile_m, D, rope_bytes, out_bytes, budget)
    assert Skv % tile_kv == 0, "kv tile must divide S_kv"

    # Causal alignment (triu, k=1) masks every key index >= S_q for every
    # query: kv tiles entirely past S_q contribute exactly zero -> skip them.
    kv_limit = min(Skv, Sq) if have_causal else Skv
    num_kv = max(1, pl.cdiv(kv_limit, tile_kv))
    single_kv = (num_kv == 1)
    num_m = M // tile_m

    # Fold heads into the MXU M dimension (contiguous -> free reshape); cast
    # the small matmul operands to bf16 (MXU-native), keep rope as given.
    q2 = q_nope_with_k_up.reshape(B, M, D).astype(jnp.bfloat16)
    ckv = compressed_kv.astype(jnp.bfloat16)
    rope2 = rope_attention.reshape(B, M, Skv)

    inputs = [q2, ckv, rope2]
    in_specs = [
        pl.BlockSpec((1, tile_m, D), lambda b, mi, kv: (b, mi, 0)),        # q
        pl.BlockSpec((1, tile_kv, D), lambda b, mi, kv: (b, kv, 0)),       # ckv
        pl.BlockSpec((1, tile_m, tile_kv), lambda b, mi, kv: (b, mi, kv)), # rope
    ]
    if have_mask:
        # Pre-multiplied additive bias: -1e30 where masked, 0 elsewhere.
        mask_bias = jnp.where(mask == 1, jnp.float32(_MASK_BIAS),
                              jnp.float32(0.0)).reshape(B, 1, Skv)
        inputs.append(mask_bias)
        in_specs.append(
            pl.BlockSpec((1, 1, tile_kv), lambda b, mi, kv: (b, 0, kv)))

    scratch_shapes = []
    if not single_kv:
        scratch_shapes = [
            pltpu.VMEM((tile_m, 1), jnp.float32),   # running max m
            pltpu.VMEM((tile_m, 1), jnp.float32),   # running sum l
            pltpu.VMEM((tile_m, D), jnp.float32),   # output accumulator
        ]

    kernel = functools.partial(
        _attention_score_kernel,
        inv_scale=inv_scale, have_mask=have_mask, have_causal=have_causal,
        single_kv=single_kv, sq=Sq, tile_m=tile_m, tile_kv=tile_kv)

    grid_spec = pltpu.PrefetchScalarGridSpec(
        num_scalar_prefetch=0,
        grid=(B, num_m, num_kv),                      # kv reduction innermost
        in_specs=in_specs,
        out_specs=pl.BlockSpec((1, tile_m, D), lambda b, mi, kv: (b, mi, 0)),
        scratch_shapes=scratch_shapes)

    vmem_need = _vmem_estimate(tile_m, tile_kv, D, rope_bytes, out_bytes)
    vmem_limit = int(min(cap * 3 // 4, max(32 * 1024 * 1024, 2 * vmem_need)))

    out = pl.pallas_call(
        kernel,
        out_shape=jax.ShapeDtypeStruct((B, M, D), out_dtype),
        grid_spec=grid_spec,
        compiler_params=pltpu.CompilerParams(
            dimension_semantics=("parallel", "parallel", "arbitrary"),
            vmem_limit_bytes=vmem_limit),
    )(*inputs)

    return out.reshape(B, H, Sq, D)


def ref_attention_score(q, ckv, rope, mask, have_causal_mask, *, rope_dim,
                        nope_dim):
    """Pure-JAX reference mirroring the PyTorch module semantics (f32)."""
    nope = jnp.einsum('bhqd,bkd->bhqk', q, ckv, precision=lax.Precision.HIGHEST)
    att = (rope + nope) / math.sqrt(rope_dim + nope_dim)
    if mask is not None:
        m = jnp.broadcast_to(mask[:, None, None, :], att.shape)
        if have_causal_mask:
            causal = jnp.triu(
                jnp.ones((att.shape[-2], att.shape[-1]), jnp.float32), k=1)
            causal = jnp.broadcast_to(causal[None, None], att.shape)
            m = jnp.where(causal == 1, causal, m)
        att = jnp.where(m == 1, -jnp.inf, att)
    att = jax.nn.softmax(att, axis=-1)
    return jnp.einsum('bhqk,bkd->bhqd', att, ckv,
                      precision=lax.Precision.HIGHEST)


if __name__ == "__main__":
    # Small MLA-like config; S_kv large enough to exercise the kv tiling.
    B, H, Sq, Skv, D_kv = 2, 4, 8, 256, 32
    rope_dim, nope_dim = 16, 16

    key = jax.random.PRNGKey(0)
    k1, k2, k3, k4 = jax.random.split(key, 4)

    q = jax.random.normal(k1, (B, H, Sq, D_kv), jnp.float32)
    ckv = jax.random.normal(k2, (B, Skv, D_kv), jnp.float32)
    rope = jax.random.normal(k3, (B, H, Sq, Skv), jnp.float32)
    # Padding mask: 1.0 == masked-out key.  Key 0 kept unmasked so no row is
    # fully masked (a row masked everywhere is NaN in the reference; the
    # kernel would return a uniform average instead -- degenerate input).
    mask = (jax.random.uniform(k4, (B, Skv)) > 0.7).astype(jnp.float32)
    mask = mask.at[:, 0].set(0.0)

    # bf16 MXU inputs -> compare against the f32 reference at bf16 tolerance.
    tol = dict(atol=5e-2, rtol=5e-2)

    # Case 1: padding + causal mask.  The module's triu(k=1) alignment masks
    # every key >= Sq, so the kv grid collapses to one tile (fast path).
    out1 = attention_score(q, ckv, rope, mask, True,
                           rope_dim=rope_dim, nope_dim=nope_dim, kv_tile=128)
    out1 = jax.block_until_ready(out1)
    ref1 = ref_attention_score(q, ckv, rope, mask, True,
                               rope_dim=rope_dim, nope_dim=nope_dim)
    assert out1.shape == (B, H, Sq, D_kv)
    assert jnp.allclose(out1, ref1, **tol), "mismatch (causal + padding mask)"

    # Case 2: padding mask only, 2 kv tiles -> exercises the online softmax.
    out2 = attention_score(q, ckv, rope, mask, False,
                           rope_dim=rope_dim, nope_dim=nope_dim, kv_tile=128)
    out2 = jax.block_until_ready(out2)
    ref2 = ref_attention_score(q, ckv, rope, mask, False,
                               rope_dim=rope_dim, nope_dim=nope_dim)
    assert jnp.allclose(out2, ref2, **tol), "mismatch (padding mask)"

    # Case 3: no mask, 2 kv tiles (mask tensor is neither built nor DMAed).
    out3 = attention_score(q, ckv, rope, None, False,
                           rope_dim=rope_dim, nope_dim=nope_dim, kv_tile=128)
    out3 = jax.block_until_ready(out3)
    ref3 = ref_attention_score(q, ckv, rope, None, False,
                               rope_dim=rope_dim, nope_dim=nope_dim)
    assert jnp.allclose(out3, ref3, **tol), "mismatch (no mask)"

    print("KERNEL_OK")
</pallas_src>

<mosaic_0001>
module attributes {stable_mosaic.version = 11 : i64} {
  func.func @_attention_score_kernel(%arg0: i32, %arg1: i32, %arg2: i32, %arg3: memref<1x32x32xbf16, #tpu.memory_space<vmem>>, %arg4: memref<1x128x32xbf16, #tpu.memory_space<vmem>>, %arg5: memref<1x32x128xf32, #tpu.memory_space<vmem>>, %arg6: memref<1x1x128xf32, #tpu.memory_space<vmem>>, %arg7: memref<1x32x32xf32, #tpu.memory_space<vmem>>) attributes {dimension_semantics = [#tpu.dimension_semantics<parallel>, #tpu.dimension_semantics<parallel>, #tpu.dimension_semantics<arbitrary>], iteration_bounds = array<i64: 2, 1, 1>, scalar_prefetch = 0 : i64, scratch_operands = 0 : i64, tpu.core_type = #tpu.core_type<tc>, window_params = [{transform_indices = @transform_0, window_bounds = array<i64: 1, 32, 32>}, {transform_indices = @transform_1, window_bounds = array<i64: 1, 128, 32>}, {transform_indices = @transform_2, window_bounds = array<i64: 1, 32, 128>}, {transform_indices = @transform_3, window_bounds = array<i64: 1, 1, 128>}, {transform_indices = @transform_4, window_bounds = array<i64: 1, 32, 32>}]} {
    %c0 = arith.constant 0 : index
    %c0_0 = arith.constant 0 : index
    %c0_1 = arith.constant 0 : index
    %0 = vector.load %arg3[%c0, %c0_0, %c0_1] : memref<1x32x32xbf16, #tpu.memory_space<vmem>>, vector<1x32x32xbf16>
    %1 = vector.shape_cast %0 : vector<1x32x32xbf16> to vector<32x32xbf16>
    %c0_2 = arith.constant 0 : index
    %c0_3 = arith.constant 0 : index
    %c0_4 = arith.constant 0 : index
    %2 = vector.load %arg4[%c0_2, %c0_3, %c0_4] : memref<1x128x32xbf16, #tpu.memory_space<vmem>>, vector<1x128x32xbf16>
    %3 = vector.shape_cast %2 : vector<1x128x32xbf16> to vector<128x32xbf16>
    %cst = arith.constant dense<0.000000e+00> : vector<32x128xf32>
    %4 = tpu.matmul %1, %3, %cst {dimension_numbers = #tpu.dot_dimension_numbers<[1], [1], [0], [0], [0, 0, 1, 0], [], []>} : vector<32x32xbf16>, vector<128x32xbf16>, vector<32x128xf32> -> vector<32x128xf32>
    %c0_5 = arith.constant 0 : index
    %c0_6 = arith.constant 0 : index
    %c0_7 = arith.constant 0 : index
    %5 = vector.load %arg5[%c0_5, %c0_6, %c0_7] : memref<1x32x128xf32, #tpu.memory_space<vmem>>, vector<1x32x128xf32>
    %6 = vector.shape_cast %5 : vector<1x32x128xf32> to vector<32x128xf32>
    %7 = arith.addf %6, %4 : vector<32x128xf32>
    %cst_8 = arith.constant 0.176776692 : f32
    %8 = vector.broadcast %cst_8 : f32 to vector<32x128xf32>
    %9 = arith.mulf %7, %8 : vector<32x128xf32>
    %c0_9 = arith.constant 0 : index
    %c0_10 = arith.constant 0 : index
    %c0_11 = arith.constant 0 : index
    %10 = vector.load %arg6[%c0_9, %c0_10, %c0_11] : memref<1x1x128xf32, #tpu.memory_space<vmem>>, vector<1x1x128xf32>
    %11 = vector.shape_cast %10 : vector<1x1x128xf32> to vector<1x128xf32>
    %12 = vector.broadcast %11 : vector<1x128xf32> to vector<32x128xf32>
    %13 = arith.addf %9, %12 : vector<32x128xf32>
    %c32_i32 = arith.constant 32 : i32
    %14 = arith.muli %arg1, %c32_i32 : i32
    %15 = tpu.iota {dimensions = array<i32: 0>} : vector<32x1xi32>
    %16 = vector.broadcast %14 : i32 to vector<32x1xi32>
    %17 = arith.addi %16, %15 : vector<32x1xi32>
    %c8_i32 = arith.constant 8 : i32
    %c0_i32 = arith.constant 0 : i32
    %18 = arith.cmpi eq, %c8_i32, %c0_i32 : i32
    %c1_i32 = arith.constant 1 : i32
    %19 = arith.select %18, %c1_i32, %c8_i32 : i32
    %20 = vector.broadcast %19 : i32 to vector<32x1xi32>
    %21 = arith.remsi %17, %20 : vector<32x1xi32>
    %c0_i32_12 = arith.constant 0 : i32
    %22 = vector.broadcast %c0_i32_12 : i32 to vector<32x1xi32>
    %23 = arith.cmpi ne, %21, %22 : vector<32x1xi32>
    %c0_i32_13 = arith.constant 0 : i32
    %24 = vector.broadcast %c0_i32_13 : i32 to vector<32x1xi32>
    %25 = arith.cmpi slt, %21, %24 : vector<32x1xi32>
    %c0_i32_14 = arith.constant 0 : i32
    %26 = arith.cmpi slt, %19, %c0_i32_14 : i32
    %27 = vector.broadcast %26 : i1 to vector<32x1xi1>
    %28 = vector.broadcast %27 : vector<32x1xi1> to vector<32x1xi1>
    %29 = arith.xori %25, %28 : vector<32x1xi1>
    %30 = arith.andi %29, %23 : vector<32x1xi1>
    %31 = vector.broadcast %19 : i32 to vector<32x1xi32>
    %32 = arith.addi %21, %31 : vector<32x1xi32>
    %33 = arith.select %30, %32, %21 : vector<32x1xi1>, vector<32x1xi32>
    %c128_i32 = arith.constant 128 : i32
    %34 = arith.muli %arg2, %c128_i32 : i32
    %35 = tpu.iota {dimensions = array<i32: 1>} : vector<32x128xi32>
    %36 = vector.broadcast %34 : i32 to vector<32x128xi32>
    %37 = arith.addi %36, %35 : vector<32x128xi32>
    %38 = vector.broadcast %33 : vector<32x1xi32> to vector<32x128xi32>
    %39 = arith.cmpi sgt, %37, %38 : vector<32x128xi32>
    %cst_15 = arith.constant -1.000000e+30 : f32
    %40 = vector.broadcast %cst_15 : f32 to vector<32x128xf32>
    %41 = arith.select %39, %40, %13 : vector<32x128xi1>, vector<32x128xf32>
    %cst_16 = arith.constant dense<0xFF800000> : vector<32xf32>
    %42 = vector.multi_reduction <maximumf>, %41, %cst_16 [1] : vector<32x128xf32> to vector<32xf32>
    %43 = vector.shape_cast %42 : vector<32xf32> to vector<32x1xf32>
    %44 = vector.broadcast %43 : vector<32x1xf32> to vector<32x128xf32>
    %45 = arith.subf %41, %44 : vector<32x128xf32>
    %46 = math.exp %45 : vector<32x128xf32>
    %cst_17 = arith.constant dense<0.000000e+00> : vector<32xf32>
    %47 = vector.multi_reduction <add>, %46, %cst_17 [1] : vector<32x128xf32> to vector<32xf32>
    %48 = vector.shape_cast %47 : vector<32xf32> to vector<32x1xf32>
    %49 = arith.truncf %46 : vector<32x128xf32> to vector<32x128xbf16>
    %cst_18 = arith.constant dense<0.000000e+00> : vector<32x32xf32>
    %50 = tpu.matmul %49, %3, %cst_18 {dimension_numbers = #tpu.dot_dimension_numbers<[1], [0], [0], [1], [0, 0, 1, 1], [], []>} : vector<32x128xbf16>, vector<128x32xbf16>, vector<32x32xf32> -> vector<32x32xf32>
    %51 = vector.broadcast %48 : vector<32x1xf32> to vector<32x32xf32>
    %52 = arith.divf %50, %51 : vector<32x32xf32>
    %c0_19 = arith.constant 0 : index
    %c0_20 = arith.constant 0 : index
    %c0_21 = arith.constant 0 : index
    %53 = vector.load %arg7[%c0_19, %c0_20, %c0_21] : memref<1x32x32xf32, #tpu.memory_space<vmem>>, vector<1x32x32xf32>
    %54 = vector.shape_cast %53 : vector<1x32x32xf32> to vector<32x32xf32>
    %55 = vector.shape_cast %52 : vector<32x32xf32> to vector<1x32x32xf32>
    tpu.vector_store %arg7[%c0_19, %c0_20, %c0_21], %55 {strides = array<i32>} : memref<1x32x32xf32, #tpu.memory_space<vmem>>, vector<1x32x32xf32>,
    return
  }
  func.func @transform_0(%arg0: i32, %arg1: i32, %arg2: i32) -> (i32, i32, i32) {
    %c0_i32 = arith.constant 0 : i32
    %c0_i32_0 = arith.constant 0 : i32
    return %arg0, %arg1, %c0_i32 : i32, i32, i32
  }
  func.func @transform_1(%arg0: i32, %arg1: i32, %arg2: i32) -> (i32, i32, i32) {
    %c0_i32 = arith.constant 0 : i32
    %c0_i32_0 = arith.constant 0 : i32
    return %arg0, %arg2, %c0_i32 : i32, i32, i32
  }
  func.func @transform_2(%arg0: i32, %arg1: i32, %arg2: i32) -> (i32, i32, i32) {
    %c0_i32 = arith.constant 0 : i32
    return %arg0, %arg1, %arg2 : i32, i32, i32
  }
  func.func @transform_3(%arg0: i32, %arg1: i32, %arg2: i32) -> (i32, i32, i32) {
    %c0_i32 = arith.constant 0 : i32
    %c0_i32_0 = arith.constant 0 : i32
    return %arg0, %c0_i32, %arg2 : i32, i32, i32
  }
  func.func @transform_4(%arg0: i32, %arg1: i32, %arg2: i32) -> (i32, i32, i32) {
    %c0_i32 = arith.constant 0 : i32
    %c0_i32_0 = arith.constant 0 : i32
    return %arg0, %arg1, %c0_i32 : i32, i32, i32
  }
}

</mosaic_0001>

<llo_original>
// kernel: tpu_custom_call.1
$region0: #{tpu_custom_call.1}
  #allocation0 [shape = 'u32[]', space=smem, size = 0x4, offset = 0x4, fixed_abs, tag = 'smem constant byte address 0x4 - core index']
  #allocation1 [shape = 'u32[144,128]{1,0:T(1,128)}', space=vmem, size = 0x12000, scoped, tag = 'internal scratch']
  %s0 = inlined_call_operand.vmem [shape: bf16[2,32,32], index: 0, kind: input, shape index: {}]
  %s1 = inlined_call_operand.vmem [shape: bf16[2,256,32], index: 1, kind: input, shape index: {}]
  %s2 = inlined_call_operand.vmem [shape: f32[2,32,256], index: 2, kind: input, shape index: {}]
  %s3 = inlined_call_operand.vmem [shape: f32[2,1,256], index: 3, kind: input, shape index: {}]
  %s4 = inlined_call_operand.hbm [shape: f32[2,32,32], index: 4, kind: output, shape index: {}]
  %s5 = sld [smem:[#allocation0]]
  $region87: #{tpu_custom_call.1} parent=0
    _
  %s7 = ssub.s32 1, %s5
  %s8 = scalar_select 0, %s7, %s5
  $region1: #{tpu_custom_call.1} parent=0
    #allocation2 [shape = 'u8[32768]{0}', space=vmem, size = 0x8000, scoped, tag = 'input window, operand 2']
    #allocation3 [shape = 'u8[32768]{0}', space=vmem, size = 0x8000, scoped, tag = 'output window, operand 0']
    #allocation4 [shape = 's32[2]{0}', space=sflag, size = 0x8, scoped, tag = 'scoped memory for tpu_custom_call.1']
    %9 = vsyncpa [#allocation4], 0
    %s10 = scalar_lea.sflag [#allocation4], 1
    %11 = vsyncpa %s10, 0
    loop: start=0, step=1, limit=4
    $region2: #{tpu_custom_call.1} parent=1 // loop_pre_header
      _
    $region3: #{tpu_custom_call.1} parent=1 // loop_header
      %s13 = sphi 0, %s17
      %p14 = scmp.ge.s32.totalorder %s13, 4
      %s20 = sphi 0, %s39
      %s21 = sphi 0, %s35
      %s22 = sphi 0, %s31
      %s23 = sphi 0, %s20
      %s24 = sphi 0, %s21
      %s25 = sphi 0, %s22
      %s26 = sphi 0, %s23
      %s27 = sphi 0, %s24
      %s28 = sphi 0, %s25
      %s44 = sphi 0, %s46
      %s47 = sphi 0, %s44
      %s48 = sphi 0, %s47
      %s64 = sphi 0, %s48
      %s72 = sphi 0, %s74
      %s75 = sphi 0, %s72
      %s76 = sphi 0, %s75
      %s92 = sphi 0, %s76
      %s102 = sphi 0, %s104
      %s105 = sphi 0, %s102
      %s106 = sphi 0, %s105
      %s122 = sphi 0, %s106
      %s130 = sphi 0, %s132
      %s133 = sphi 0, %s130
      %s134 = sphi 0, %s133
      %s150 = sphi 0, %s134
      %s158 = sphi 0, %s160
      %s161 = sphi 0, %s158
      %s162 = sphi 0, %s161
      %s178 = sphi 0, %s162
    $region4: #{tpu_custom_call.1} parent=1 // loop_header_branch
      %16 = sbr.rel (%p14) target = $region8
    $region5: #{tpu_custom_call.1} parent=1 // loop_body
      %s18 = ssub.s32 %s13, 1
      %s19 = ssub.s32 %s13, 2
      %s29 = sadd.s32 1, %s22
      %p30 = scmp.ge.s32.totalorder %s29, 1
      %s31 = scalar_select %p30, 0, %s29
      %s32 = sadd.s32 1, %s21
      %s33 = scalar_select %p30, %s32, %s21
      %p34 = scmp.ge.s32.totalorder %s33, 1
      %s35 = scalar_select %p34, 0, %s33
      %s36 = sadd.s32 1, %s20
      %s37 = scalar_select %p34, %s36, %s20
      %p38 = scmp.ge.s32.totalorder %s37, 2
      %s39 = scalar_select %p38, 0, %s37
      %s40 = ssub.s32 %s20, %s39
      %s41 = ssub.s32 %s21, %s35
      %s42 = sor.u32 %s40, %s41
      %p43 = scmp.eq.s32.totalorder %s42, 0
      %s45 = sadd.s32 %s44, 1
      %s46 = scalar_select %p43, %s44, %s45
      %p49 = pneg %p43
      %p50 = scmp.eq.s32.totalorder %s13, 1
      %p51 = por %p49, %p50
      %p52 = scmp.ne.s32.totalorder %s44, %s47
      %p53 = scmp.eq.s32.totalorder %s13, 0
      %p54 = por %p52, %p53
      %p55 = scmp.ne.s32.totalorder %s44, %s47
      %p56 = scmp.eq.s32.totalorder %s18, 1
      %p57 = por %p55, %p56
      %p58 = scmp.ne.s32.totalorder %s47, %s48
      %p59 = scmp.eq.s32.totalorder %s18, 0
      %p60 = por %p58, %p59
      %p61 = scmp.ne.s32.totalorder %s47, %s48
      %p62 = scmp.eq.s32.totalorder %s19, 1
      %p63 = por %p61, %p62
      %p65 = scmp.ne.s32.totalorder %s48, %s64
      %p66 = scmp.eq.s32.totalorder %s19, 0
      %p67 = por %p65, %p66
      %s68 = ssub.s32 %s20, %s39
      %s69 = ssub.s32 %s22, %s31
      %s70 = sor.u32 %s68, %s69
      %p71 = scmp.eq.s32.totalorder %s70, 0
      %s73 = sadd.s32 %s72, 1
      %s74 = scalar_select %p71, %s72, %s73
      %p77 = pneg %p71
      %p78 = scmp.eq.s32.totalorder %s13, 1
      %p79 = por %p77, %p78
      %p80 = scmp.ne.s32.totalorder %s72, %s75
      %p81 = scmp.eq.s32.totalorder %s13, 0
      %p82 = por %p80, %p81
      %p83 = scmp.ne.s32.totalorder %s72, %s75
      %p84 = scmp.eq.s32.totalorder %s18, 1
      %p85 = por %p83, %p84
      %p86 = scmp.ne.s32.totalorder %s75, %s76
      %p87 = scmp.eq.s32.totalorder %s18, 0
      %p88 = por %p86, %p87
      %p89 = scmp.ne.s32.totalorder %s75, %s76
      %p90 = scmp.eq.s32.totalorder %s19, 1
      %p91 = por %p89, %p90
      %p93 = scmp.ne.s32.totalorder %s76, %s92
      %p94 = scmp.eq.s32.totalorder %s19, 0
      %p95 = por %p93, %p94
      %s96 = ssub.s32 %s20, %s39
      %s97 = ssub.s32 %s21, %s35
      %s98 = sor.u32 %s96, %s97
      %s99 = ssub.s32 %s22, %s31
      %s100 = sor.u32 %s98, %s99
      %p101 = scmp.eq.s32.totalorder %s100, 0
      %s103 = sadd.s32 %s102, 1
      %s104 = scalar_select %p101, %s102, %s103
      %p107 = pneg %p101
      %p108 = scmp.eq.s32.totalorder %s13, 1
      %p109 = por %p107, %p108
      %p110 = scmp.ne.s32.totalorder %s102, %s105
      %p111 = scmp.eq.s32.totalorder %s13, 0
      %p112 = por %p110, %p111
      %p113 = scmp.ne.s32.totalorder %s102, %s105
      %p114 = scmp.eq.s32.totalorder %s18, 1
      %p115 = por %p113, %p114
      %p116 = scmp.ne.s32.totalorder %s105, %s106
      %p117 = scmp.eq.s32.totalorder %s18, 0
      %p118 = por %p116, %p117
      %p119 = scmp.ne.s32.totalorder %s105, %s106
      %p120 = scmp.eq.s32.totalorder %s19, 1
      %p121 = por %p119, %p120
      %p123 = scmp.ne.s32.totalorder %s106, %s122
      %p124 = scmp.eq.s32.totalorder %s19, 0
      %p125 = por %p123, %p124
      %s126 = ssub.s32 %s20, %s39
      %s127 = ssub.s32 %s22, %s31
      %s128 = sor.u32 %s126, %s127
      %p129 = scmp.eq.s32.totalorder %s128, 0
      %s131 = sadd.s32 %s130, 1
      %s132 = scalar_select %p129, %s130, %s131
      %p135 = pneg %p129
      %p136 = scmp.eq.s32.totalorder %s13, 1
      %p137 = por %p135, %p136
      %p138 = scmp.ne.s32.totalorder %s130, %s133
      %p139 = scmp.eq.s32.totalorder %s13, 0
      %p140 = por %p138, %p139
      %p141 = scmp.ne.s32.totalorder %s130, %s133
      %p142 = scmp.eq.s32.totalorder %s18, 1
      %p143 = por %p141, %p142
      %p144 = scmp.ne.s32.totalorder %s133, %s134
      %p145 = scmp.eq.s32.totalorder %s18, 0
      %p146 = por %p144, %p145
      %p147 = scmp.ne.s32.totalorder %s133, %s134
      %p148 = scmp.eq.s32.totalorder %s19, 1
      %p149 = por %p147, %p148
      %p151 = scmp.ne.s32.totalorder %s134, %s150
      %p152 = scmp.eq.s32.totalorder %s19, 0
      %p153 = por %p151, %p152
      %s154 = ssub.s32 %s20, %s39
      %s155 = ssub.s32 %s21, %s35
      %s156 = sor.u32 %s154, %s155
      %p157 = scmp.eq.s32.totalorder %s156, 0
      %s159 = sadd.s32 %s158, 1
      %s160 = scalar_select %p157, %s158, %s159
      %p163 = pneg %p157
      %p164 = scmp.eq.s32.totalorder %s13, 1
      %p165 = por %p163, %p164
      %p166 = scmp.ne.s32.totalorder %s158, %s161
      %p167 = scmp.eq.s32.totalorder %s13, 0
      %p168 = por %p166, %p167
      %p169 = scmp.ne.s32.totalorder %s158, %s161
      %p170 = scmp.eq.s32.totalorder %s18, 1
      %p171 = por %p169, %p170
      %p172 = scmp.ne.s32.totalorder %s161, %s162
      %p173 = scmp.eq.s32.totalorder %s18, 0
      %p174 = por %p172, %p173
      %p175 = scmp.ne.s32.totalorder %s161, %s162
      %p176 = scmp.eq.s32.totalorder %s19, 1
      %p177 = por %p175, %p176
      %p179 = scmp.ne.s32.totalorder %s162, %s178
      %p180 = scmp.eq.s32.totalorder %s19, 0
      %p181 = por %p179, %p180
      %p182 = scmp.le.s32.totalorder 1, %s13
      %p183 = scmp.lt.s32.totalorder %s13, 3
      %p184 = pnand %p182, %p183
      %p185 = pneg %p184
      // Predicated region
      $region9: #{tpu_custom_call.1} parent=5 // pred_check
        _
      $region10: #{tpu_custom_call.1} parent=5 // pred_check_branch
        %187 = sbr.rel (%p184) target = $region12
      $region11: #{tpu_custom_call.1} parent=5 // pred_region
        %s188 = ssub.s32 %s13, 1
      $region12: #{tpu_custom_call.1} parent=5 // pred_fallthru
        _
      %p189 = scmp.lt.s32.totalorder %s13, 2
      // Predicated region
      $region13: #{tpu_custom_call.1} parent=5 // pred_check
        %p190 = pneg %p189
      $region14: #{tpu_custom_call.1} parent=5 // pred_check_branch
        %192 = sbr.rel (%p190) target = $region16
      $region15: #{tpu_custom_call.1} parent=5 // pred_region
        // Predicated region
        $region17: #{tpu_custom_call.1} parent=15 // pred_check
          %p193 = pneg %p54
        $region18: #{tpu_custom_call.1} parent=15 // pred_check_branch
          %195 = sbr.rel (%p193) target = $region20
        $region19: #{tpu_custom_call.1} parent=15 // pred_region
          %s196 = smul.u32 4, %s21
          %p197 = scmp.lt.s32.totalorder %s20, 1
          %s198 = scalar_select %p197, %s20, 1
          %p199 = scmp.lt.s32.totalorder %s196, 3
          %s200 = scalar_select %p199, %s196, 3
          %s201 = smul.addr %s198, 4
          %s202 = sadd.s32 %s200, %s201
          %s203 = smul.addr %s202, 4
          %s204 = scalar_lea.vmem %s0, %s203
          %s205 = smul.u32 4, %s21
        $region20: #{tpu_custom_call.1} parent=15 // pred_fallthru
          _
        // Predicated region
        $region21: #{tpu_custom_call.1} parent=15 // pred_check
          %p206 = pneg %p82
        $region22: #{tpu_custom_call.1} parent=15 // pred_check_branch
          %208 = sbr.rel (%p206) target = $region24
        $region23: #{tpu_custom_call.1} parent=15 // pred_region
          %s209 = smul.u32 16, %s22
          %p210 = scmp.lt.s32.totalorder %s20, 1
          %s211 = scalar_select %p210, %s20, 1
          %p212 = scmp.lt.s32.totalorder %s209, 31
          %s213 = scalar_select %p212, %s209, 31
          %s214 = smul.addr %s211, 32
          %s215 = sadd.s32 %s213, %s214
          %s216 = smul.addr %s215, 4
          %s217 = scalar_lea.vmem %s1, %s216
          %s218 = smul.u32 16, %s22
        $region24: #{tpu_custom_call.1} parent=15 // pred_fallthru
          _
        // Predicated region
        $region25: #{tpu_custom_call.1} parent=15 // pred_check
          %p219 = pneg %p112
        $region26: #{tpu_custom_call.1} parent=15 // pred_check_branch
          %221 = sbr.rel (%p219) target = $region28
        $region27: #{tpu_custom_call.1} parent=15 // pred_region
          %s222 = sand.u32 %s102, 1
          %s223 = sand.u32 %s102, 1
          %s224 = smul.addr %s223, 32
          %s225 = scalar_lea.vmem [#allocation2], %s224
          %s226 = smul.u32 4, %s21
          %s227 = smul.addr %s226, 2
          %s228 = sadd.s32 %s22, %s227
          %s229 = smul.addr %s20, 8
          %s230 = sadd.s32 %s228, %s229
          %s231 = smul.addr %s230, 8
          %s232 = scalar_lea.vmem %s2, %s231
          // Predicated region
          $region29: #{tpu_custom_call.1} parent=27 // pred_check
            _
          $region30: #{tpu_custom_call.1} parent=27 // pred_check_branch
            %234 = sbr.rel (0) target = $region32
          $region31: #{tpu_custom_call.1} parent=27 // pred_region
            // Predicated region
            $region33: #{tpu_custom_call.1} parent=31 // pred_check
              _
            $region34: #{tpu_custom_call.1} parent=31 // pred_check_branch
              %236 = sbr.rel (0) target = $region36
            $region35: #{tpu_custom_call.1} parent=31 // pred_region
              // Predicated region
              $region48: #{tpu_custom_call.1} parent=35 // pred_check
                _
              $region49: #{tpu_custom_call.1} parent=35 // pred_check_branch
                %258 = sbr.rel (0) target = $region51
              $region50: #{tpu_custom_call.1} parent=35 // pred_region
                loop: start=0, step=1, limit=1
                $region52: #{tpu_custom_call.1} parent=50 // loop_pre_header
                  _
                $region53: #{tpu_custom_call.1} parent=50 // loop_header
                  %s260 = sphi 0, %s264
                  %p261 = scmp.ge.s32.totalorder %s260, 1
                  %s265 = sphi %s232, %s232
                  %s266 = sphi %s225, %s225
                $region54: #{tpu_custom_call.1} parent=50 // loop_header_branch
                  %263 = sbr.rel (%p261) target = $region58
                $region55: #{tpu_custom_call.1} parent=50 // loop_body
                  %v267 = vld [vmem:[%s265] sm:$0xff]
                  %268 = vst [vmem:[%s266] sm:$0xff] %v267
                  %v269 = vld [vmem:[%s265 + $0x10] sm:$0xff]
                  %270 = vst [vmem:[%s266 + $0x8] sm:$0xff] %v269
                  %v271 = vld [vmem:[%s265 + $0x20] sm:$0xff]
                  %272 = vst [vmem:[%s266 + $0x10] sm:$0xff] %v271
                  %v273 = vld [vmem:[%s265 + $0x30] sm:$0xff]
                  %274 = vst [vmem:[%s266 + $0x18] sm:$0xff] %v273
                $region56: #{tpu_custom_call.1} parent=50 // loop_footer
                  %s264 = sadd.s32 1, %s260
                $region57: #{tpu_custom_call.1} parent=50 // loop_footer_branch
                  %259 = sbr.rel target = $region53
                $region58: #{tpu_custom_call.1} parent=50 // loop_exit
                  _
              $region51: #{tpu_custom_call.1} parent=35 // pred_fallthru
                _
              // Predicated region
              $region59: #{tpu_custom_call.1} parent=35 // pred_check
                _
              $region60: #{tpu_custom_call.1} parent=35 // pred_check_branch
                %276 = sbr.rel target = $region62
              $region61: #{tpu_custom_call.1} parent=35 // pred_region
                _
              $region62: #{tpu_custom_call.1} parent=35 // pred_fallthru
                _
            $region36: #{tpu_custom_call.1} parent=31 // pred_fallthru
              _
            // Predicated region
            $region37: #{tpu_custom_call.1} parent=31 // pred_check
              _
            $region38: #{tpu_custom_call.1} parent=31 // pred_check_branch
              %238 = sbr.rel target = $region40
            $region39: #{tpu_custom_call.1} parent=31 // pred_region
              %s240 = ssub.s32 256, 1
              loop: start=0, step=1, limit=1
              $region41: #{tpu_custom_call.1} parent=39 // loop_pre_header
                _
              $region42: #{tpu_custom_call.1} parent=39 // loop_header
                %s242 = sphi 0, %s246
                %p243 = scmp.ge.s32.totalorder %s242, 1
                %s247 = sphi %s232, %s232
                %s248 = sphi %s225, %s225
              $region43: #{tpu_custom_call.1} parent=39 // loop_header_branch
                %245 = sbr.rel (%p243) target = $region47
              $region44: #{tpu_custom_call.1} parent=39 // loop_body
                %v249 = vld [vmem:[%s247] sm:%s240]
                %250 = vst [vmem:[%s248] sm:%s240] %v249
                %v251 = vld [vmem:[%s247 + $0x10] sm:%s240]
                %252 = vst [vmem:[%s248 + $0x8] sm:%s240] %v251
                %v253 = vld [vmem:[%s247 + $0x20] sm:%s240]
                %254 = vst [vmem:[%s248 + $0x10] sm:%s240] %v253
                %v255 = vld [vmem:[%s247 + $0x30] sm:%s240]
                %256 = vst [vmem:[%s248 + $0x18] sm:%s240] %v255
              $region45: #{tpu_custom_call.1} parent=39 // loop_footer
                %s246 = sadd.s32 1, %s242
              $region46: #{tpu_custom_call.1} parent=39 // loop_footer_branch
                %241 = sbr.rel target = $region42
              $region47: #{tpu_custom_call.1} parent=39 // loop_exit
                _
            $region40: #{tpu_custom_call.1} parent=31 // pred_fallthru
              _
          $region32: #{tpu_custom_call.1} parent=27 // pred_fallthru
            _
          %277 = vnop
        $region28: #{tpu_custom_call.1} parent=15 // pred_fallthru
          _
        // Predicated region
        $region63: #{tpu_custom_call.1} parent=15 // pred_check
          %p278 = pneg %p140
        $region64: #{tpu_custom_call.1} parent=15 // pred_check_branch
          %280 = sbr.rel (%p278) target = $region66
        $region65: #{tpu_custom_call.1} parent=15 // pred_region
          %p281 = scmp.lt.s32.totalorder %s20, 1
          %s282 = scalar_select %p281, %s20, 1
          %p283 = scmp.lt.s32.totalorder %s22, 1
          %s284 = scalar_select %p283, %s22, 1
          %s285 = smul.addr %s282, 2
          %s286 = sadd.s32 %s284, %s285
          %s287 = scalar_lea.vmem %s3, %s286
        $region66: #{tpu_custom_call.1} parent=15 // pred_fallthru
          _
      $region16: #{tpu_custom_call.1} parent=5 // pred_fallthru
        _
      %p288 = scmp.le.s32.totalorder 1, %s13
      %p289 = scmp.lt.s32.totalorder %s13, 3
      %p290 = pnand %p288, %p289
      %p291 = pneg %p290
      // Predicated region
      $region67: #{tpu_custom_call.1} parent=5 // pred_check
        _
      $region68: #{tpu_custom_call.1} parent=5 // pred_check_branch
        %293 = sbr.rel (%p290) target = $region70
      $region69: #{tpu_custom_call.1} parent=5 // pred_region
        %s294 = ssub.s32 %s13, 1
        %s295 = sand.u32 %s105, 1
        %s296 = sand.u32 %s105, 1
        %s297 = smul.addr %s296, 32
        %s298 = scalar_lea.vmem [#allocation2], %s297
        // Predicated region
        $region71: #{tpu_custom_call.1} parent=69 // pred_check
          %p299 = pneg %p118
        $region72: #{tpu_custom_call.1} parent=69 // pred_check_branch
          %301 = sbr.rel (%p299) target = $region74
        $region73: #{tpu_custom_call.1} parent=69 // pred_region
          _
        $region74: #{tpu_custom_call.1} parent=69 // pred_fallthru
          _
        %s302 = smul.u32 4, %s24
        %p303 = scmp.lt.s32.totalorder %s23, 1
        %s304 = scalar_select %p303, %s23, 1
        %p305 = scmp.lt.s32.totalorder %s302, 3
        %s306 = scalar_select %p305, %s302, 3
        %s307 = smul.addr %s304, 4
        %s308 = sadd.s32 %s306, %s307
        %s309 = smul.addr %s308, 4
        %s310 = scalar_lea.vmem %s0, %s309
        %p311 = pneg %p60
        %p312 = pneg %p57
        %s313 = smul.u32 16, %s25
        %p314 = scmp.lt.s32.totalorder %s23, 1
        %s315 = scalar_select %p314, %s23, 1
        %p316 = scmp.lt.s32.totalorder %s313, 31
        %s317 = scalar_select %p316, %s313, 31
        %s318 = smul.addr %s315, 32
        %s319 = sadd.s32 %s317, %s318
        %s320 = smul.addr %s319, 4
        %s321 = scalar_lea.vmem %s1, %s320
        %p322 = pneg %p88
        %p323 = pneg %p85
        %s324 = sand.u32 %s105, 1
        %s325 = sand.u32 %s105, 1
        %s326 = smul.addr %s325, 32
        %s327 = scalar_lea.vmem [#allocation2], %s326
        %p328 = pneg %p118
        %p329 = pneg %p115
        %p330 = scmp.lt.s32.totalorder %s23, 1
        %s331 = scalar_select %p330, %s23, 1
        %p332 = scmp.lt.s32.totalorder %s25, 1
        %s333 = scalar_select %p332, %s25, 1
        %s334 = smul.addr %s331, 2
        %s335 = sadd.s32 %s333, %s334
        %s336 = scalar_lea.vmem %s3, %s335
        %p337 = pneg %p146
        %p338 = pneg %p143
        %p339 = pneg %p174
        %p340 = pneg %p171
        %s341 = sand.u32 %s161, 1
        %s342 = scalar_lea.sflag [#allocation4], %s341
        %s343 = sand.u32 %s161, 1
        %s344 = smul.addr %s343, 32
        %s345 = scalar_lea.vmem [#allocation3], %s344
        %s346 = smul.u32 4, %s24
        %p347 = scmp.lt.s32.totalorder %s23, 1
        %s348 = scalar_select %p347, %s23, 1
        %p349 = scmp.lt.s32.totalorder %s346, 3
        %s350 = scalar_select %p349, %s346, 3
        %s351 = smul.addr %s348, 4
        %s352 = sadd.s32 %s350, %s351
        %s353 = smul.addr %s352, 4
        %s354 = scalar_lea.vmem %s0, %s353
        %s355 = smul.u32 4, %s24
        %s356 = smul.u32 16, %s25
        %p357 = scmp.lt.s32.totalorder %s23, 1
        %s358 = scalar_select %p357, %s23, 1
        %p359 = scmp.lt.s32.totalorder %s356, 31
        %s360 = scalar_select %p359, %s356, 31
        %s361 = smul.addr %s358, 32
        %s362 = sadd.s32 %s360, %s361
        %s363 = smul.addr %s362, 4
        %s364 = scalar_lea.vmem %s1, %s363
        %s365 = smul.u32 16, %s25
        %s366 = smul.u32 4, %s24
        %p367 = scmp.lt.s32.totalorder %s23, 1
        %s368 = scalar_select %p367, %s23, 1
        %p369 = scmp.lt.s32.totalorder %s25, 1
        %s370 = scalar_select %p369, %s25, 1
        %s371 = smul.addr %s368, 2
        %s372 = sadd.s32 %s370, %s371
        %s373 = scalar_lea.vmem %s3, %s372
        %s374 = smul.u32 4, %s24
        %v376 = vld [vmem:[%s354] sm:$0xf]
        %v377 = vld [vmem:[%s354 + $0x4] sm:$0xf]
        %v378 = vld [vmem:[%s354 + $0x8] sm:$0xf]
        %v379 = vld [vmem:[%s354 + $0xc] sm:$0xf]
        %v380 = vld [vmem:[%s364] sm:$0xf]
        %v381 = vld [vmem:[%s364 + $0x4] sm:$0xf]
        %v382 = vld [vmem:[%s364 + $0x8] sm:$0xf]
        %v383 = vld [vmem:[%s364 + $0xc] sm:$0xf]
        %v384 = vld [vmem:[%s364 + $0x10] sm:$0xf]
        %v385 = vld [vmem:[%s364 + $0x14] sm:$0xf]
        %v386 = vld [vmem:[%s364 + $0x18] sm:$0xf]
        %v387 = vld [vmem:[%s364 + $0x1c] sm:$0xf]
        %v388 = vld [vmem:[%s364 + $0x20] sm:$0xf]
        %v389 = vld [vmem:[%s364 + $0x24] sm:$0xf]
        %v390 = vld [vmem:[%s364 + $0x28] sm:$0xf]
        %v391 = vld [vmem:[%s364 + $0x2c] sm:$0xf]
        %v392 = vld [vmem:[%s364 + $0x30] sm:$0xf]
        %v393 = vld [vmem:[%s364 + $0x34] sm:$0xf]
        %v394 = vld [vmem:[%s364 + $0x38] sm:$0xf]
        %v395 = vld [vmem:[%s364 + $0x3c] sm:$0xf]
        %v400 = vunpack.c.l.b16 %v376
        %v401 = vunpack.c.l.b16 %v377
        %v402 = vunpack.c.l.b16 %v378
        %v403 = vunpack.c.l.b16 %v379
        %v404 = vpack.c.b16 %v401, %v400
        %v405 = vpack.c.b16 %v403, %v402
        %v422 = vunpack.c.l.b16 %v380
        %v423 = vunpack.c.l.b16 %v381
        %v424 = vunpack.c.l.b16 %v382
        %v425 = vunpack.c.l.b16 %v383
        %v426 = vunpack.c.l.b16 %v384
        %v427 = vunpack.c.l.b16 %v385
        %v428 = vunpack.c.l.b16 %v386
        %v429 = vunpack.c.l.b16 %v387
        %v430 = vunpack.c.l.b16 %v388
        %v431 = vunpack.c.l.b16 %v389
        %v432 = vunpack.c.l.b16 %v390
        %v433 = vunpack.c.l.b16 %v391
        %v434 = vunpack.c.l.b16 %v392
        %v435 = vunpack.c.l.b16 %v393
        %v436 = vunpack.c.l.b16 %v394
        %v437 = vunpack.c.l.b16 %v395
        %v438 = vpack.c.b16 %v423, %v422
        %v439 = vpack.c.b16 %v425, %v424
        %v440 = vpack.c.b16 %v427, %v426
        %v441 = vpack.c.b16 %v429, %v428
        %v442 = vpack.c.b16 %v431, %v430
        %v443 = vpack.c.b16 %v433, %v432
        %v444 = vpack.c.b16 %v435, %v434
        %v445 = vpack.c.b16 %v437, %v436
        %vm446 = vcmask 261120
        %v448 = vsel %vm446, %v404, 0
        %v451 = vsel %vm446, %v405, 0
        %v454 = vsel %vm446, %v438, 0
        %v457 = vsel %vm446, %v439, 0
        %v460 = vsel %vm446, %v440, 0
        %v463 = vsel %vm446, %v441, 0
        %v466 = vsel %vm446, %v442, 0
        %v469 = vsel %vm446, %v443, 0
        %v472 = vsel %vm446, %v444, 0
        %v475 = vsel %vm446, %v445, 0
        %477 = vmatprep.subr.bf16.mxu0 0
        %478 = vmatpush1.bf16.xpose.msra.mxu0 %v475
        %479 = vmatprep.subr.bf16.mxu0 0
        %480 = vmatpush1.bf16.xpose.msra.mxu0 %v472
        %481 = vmatprep.subr.bf16.mxu0 0
        %482 = vmatpush1.bf16.xpose.msra.mxu0 %v469
        %483 = vmatprep.subr.bf16.mxu0 0
        %484 = vmatpush1.bf16.xpose.msra.mxu0 %v466
        %485 = vmatprep.subr.bf16.mxu0 0
        %486 = vmatpush1.bf16.xpose.msra.mxu0 %v463
        %487 = vmatprep.subr.bf16.mxu0 0
        %488 = vmatpush1.bf16.xpose.msra.mxu0 %v460
        %489 = vmatprep.subr.bf16.mxu0 0
        %490 = vmatpush1.bf16.xpose.msra.mxu0 %v457
        %491 = vmatprep.subr.bf16.mxu0 0
        %492 = vmatpush1.bf16.xpose.msra.mxu0 %v454
        %493 = vmatprep.subr.bf16.mxu0 0
        %494 = vmatpush2.bf16.xpose.msra.mxu0 0
        %495 = vmatprep.subr.bf16.mxu0 0
        %496 = vmatpush2.bf16.xpose.msra.mxu0 0
        %497 = vmatprep.subr.bf16.mxu0 0
        %498 = vmatpush2.bf16.xpose.msra.mxu0 0
        %499 = vmatprep.subr.bf16.mxu0 0
        %500 = vmatpush2.bf16.xpose.msra.mxu0 0
        %501 = vmatprep.subr.bf16.mxu0 0
        %502 = vmatpush2.bf16.xpose.msra.mxu0 0
        %503 = vmatprep.subr.bf16.mxu0 0
        %504 = vmatpush2.bf16.xpose.msra.mxu0 0
        %505 = vmatprep.subr.bf16.mxu0 0
        %506 = vmatpush2.bf16.xpose.msra.mxu0 0
        %507 = vmatprep.subr.bf16.mxu0 0
        %508 = vmatpush2.bf16.xpose.msra.mxu0 0
        %509 = vmatprep.mubr.bf16.mxu0 0
        %510 = vmatmul.mubr.bf16.gmra.mxu0 %v448
        %v511 = vpop.f32.mrf.mxu0
        %v512 = vadd.f32 0.0, %v511
        %v513 = vpop.f32.mrf.mxu0
        %v514 = vpop.f32.mrf.mxu0
        %v515 = vadd.f32 0.0, %v514
        %v516 = vpop.f32.mrf.mxu0
        %517 = vmatprep.mubr.bf16.mxu0 0
        %518 = vmatmul.mubr.bf16.gmra.mxu0 %v451
        %v519 = vpop.f32.mrf.mxu0
        %v520 = vadd.f32 0.0, %v519
        %v521 = vpop.f32.mrf.mxu0
        %v522 = vpop.f32.mrf.mxu0
        %v523 = vadd.f32 0.0, %v522
        %v524 = vpop.f32.mrf.mxu0
        %525 = vdwg.mxu0
        %v526 = vld [vmem:[%s298] sm:$0xff]
        %v527 = vld [vmem:[%s298 + $0x8] sm:$0xff]
        %v528 = vld [vmem:[%s298 + $0x10] sm:$0xff]
        %v529 = vld [vmem:[%s298 + $0x18] sm:$0xff]
        %v530 = vadd.f32 %v526, %v512
        %v531 = vadd.f32 %v527, %v515
        %v532 = vadd.f32 %v528, %v520
        %v533 = vadd.f32 %v529, %v523
        %v534 = vmul.f32 %v530, 0.17677669
        %v535 = vmul.f32 %v531, 0.17677669
        %v536 = vmul.f32 %v532, 0.17677669
        %v537 = vmul.f32 %v533, 0.17677669
        %v538 = vld [vmem:[%s373] sm:$0x1]
        %v540 = vlaneseq
        %v541 = vshrl.u32 %v540, 7
        %v542 = vsub.s32 0, %v541
        %v543 = vrot.slane %v538, %v542
        %v545 = vadd.f32 %v534, %v543
        %v546 = vadd.f32 %v535, %v543
        %v547 = vadd.f32 %v536, %v543
        %v548 = vadd.f32 %v537, %v543
        %s549 = smul.u32 %s24, 32
        %v550 = vlaneseq
        %v551 = vshrl.u32 %v550, 7
        %v552 = vadd.s32 %v551, 8
        %v553 = vadd.s32 %v551, 16
        %v554 = vadd.s32 %v551, 24
        %v555 = vstv %s549
        %v556 = vadd.s32 %v555, %v551
        %v557 = vadd.s32 %v555, %v552
        %v558 = vadd.s32 %v555, %v553
        %v559 = vadd.s32 %v555, %v554
        %vm560 = vcmp.lt.s32.totalorder %v556, 0
        %v561 = vsub.s32 0, %v556
        %v562 = vsel %vm560, %v561, %v556
        %v563 = vshrl.u32 %v562, 3
        %v564 = vand.u32 %v562, 7
        %v565 = vsub.s32 0, %v564
        %v566 = vsel %vm560, %v565, %v564
        %vm567 = vcmp.lt.s32.totalorder %v557, 0
        %v568 = vsub.s32 0, %v557
        %v569 = vsel %vm567, %v568, %v557
        %v570 = vshrl.u32 %v569, 3
        %v571 = vand.u32 %v569, 7
        %v572 = vsub.s32 0, %v571
        %v573 = vsel %vm567, %v572, %v571
        %vm574 = vcmp.lt.s32.totalorder %v558, 0
        %v575 = vsub.s32 0, %v558
        %v576 = vsel %vm574, %v575, %v558
        %v577 = vshrl.u32 %v576, 3
        %v578 = vand.u32 %v576, 7
        %v579 = vsub.s32 0, %v578
        %v580 = vsel %vm574, %v579, %v578
        %vm581 = vcmp.lt.s32.totalorder %v559, 0
        %v582 = vsub.s32 0, %v559
        %v583 = vsel %vm581, %v582, %v559
        %v584 = vshrl.u32 %v583, 3
        %v585 = vand.u32 %v583, 7
        %v586 = vsub.s32 0, %v585
        %v587 = vsel %vm581, %v586, %v585
        %vm588 = vcmp.ne.s32.totalorder %v566, 0
        %vm589 = vcmp.ne.s32.totalorder %v573, 0
        %vm590 = vcmp.ne.s32.totalorder %v580, 0
        %vm591 = vcmp.ne.s32.totalorder %v587, 0
        %vm592 = vcmp.lt.s32.totalorder %v566, 0
        %vm593 = vcmp.lt.s32.totalorder %v573, 0
        %vm594 = vcmp.lt.s32.totalorder %v580, 0
        %vm595 = vcmp.lt.s32.totalorder %v587, 0
        %vm596 = vmand %vm592, %vm588
        %vm597 = vmand %vm593, %vm589
        %vm598 = vmand %vm594, %vm590
        %vm599 = vmand %vm595, %vm591
        %v600 = vadd.s32 %v566, 8
        %v601 = vadd.s32 %v573, 8
        %v602 = vadd.s32 %v580, 8
        %v603 = vadd.s32 %v587, 8
        %v604 = vsel %vm596, %v600, %v566
        %v605 = vsel %vm597, %v601, %v573
        %v606 = vsel %vm598, %v602, %v580
        %v607 = vsel %vm599, %v603, %v587
        %s608 = smul.u32 %s25, 128
        %v609 = vlaneseq
        %v610 = vand.u32 %v609, 127
        %v611 = vstv %s608
        %v612 = vadd.s32 %v611, %v610
        %vm613 = vcmp.gt.s32.totalorder %v612, %v604
        %vm614 = vcmp.gt.s32.totalorder %v612, %v605
        %vm615 = vcmp.gt.s32.totalorder %v612, %v606
        %vm616 = vcmp.gt.s32.totalorder %v612, %v607
        %v617 = vsel %vm613, -1e+30, %v545
        %v618 = vsel %vm614, -1e+30, %v546
        %v619 = vsel %vm615, -1e+30, %v547
        %v620 = vsel %vm616, -1e+30, %v548
        %621 = vmax.xlane.f32.xlu0 %v617
        %v622 = vpop.xlane.xlu0 %621
        %623 = vmax.xlane.f32.xlu0 %v618
        %v624 = vpop.xlane.xlu0 %623
        %625 = vmax.xlane.f32.xlu0 %v619
        %v626 = vpop.xlane.xlu0 %625
        %627 = vmax.xlane.f32.xlu0 %v620
        %v628 = vpop.xlane.xlu0 %627
        %v629 = vsub.f32 %v617, %v622
        %v630 = vsub.f32 %v618, %v624
        %v631 = vsub.f32 %v619, %v626
        %v632 = vsub.f32 %v620, %v628
        %v633 = vmul.f32 %v629, 1.442695
        %v634 = vpow.pop %v633
        %v635 = vmul.f32 %v630, 1.442695
        %v636 = vpow.pop %v635
        %v637 = vmul.f32 %v631, 1.442695
        %v638 = vpow.pop %v637
        %v639 = vmul.f32 %v632, 1.442695
        %v640 = vpow.pop %v639
        %641 = vadd.xlane.f32.xlu0 %v634
        %v642 = vpop.xlane.xlu0 %641
        %643 = vadd.xlane.f32.xlu0 %v636
        %v644 = vpop.xlane.xlu0 %643
        %645 = vadd.xlane.f32.xlu0 %v638
        %v646 = vpop.xlane.xlu0 %645
        %647 = vadd.xlane.f32.xlu0 %v640
        %v648 = vpop.xlane.xlu0 %647
        %v649 = vpack.c.bf16 %v636, %v634
        %v650 = vpack.c.bf16 %v640, %v638
        %659 = vmatprep.subr.bf16.mxu0 0
        %660 = vmatpush1.bf16.msra.mxu0 %v445
        %661 = vmatprep.subr.bf16.mxu0 0
        %662 = vmatpush1.bf16.msra.mxu0 %v444
        %663 = vmatprep.subr.bf16.mxu0 0
        %664 = vmatpush1.bf16.msra.mxu0 %v443
        %665 = vmatprep.subr.bf16.mxu0 0
        %666 = vmatpush1.bf16.msra.mxu0 %v442
        %667 = vmatprep.subr.bf16.mxu0 0
        %668 = vmatpush1.bf16.msra.mxu0 %v441
        %669 = vmatprep.subr.bf16.mxu0 0
        %670 = vmatpush1.bf16.msra.mxu0 %v440
        %671 = vmatprep.subr.bf16.mxu0 0
        %672 = vmatpush1.bf16.msra.mxu0 %v439
        %673 = vmatprep.subr.bf16.mxu0 0
        %674 = vmatpush1.bf16.msra.mxu0 %v438
        %675 = vmatprep.subr.bf16.mxu0 0
        %676 = vmatpush2.bf16.msra.mxu0 0
        %677 = vmatprep.subr.bf16.mxu0 0
        %678 = vmatpush2.bf16.msra.mxu0 0
        %679 = vmatprep.subr.bf16.mxu0 0
        %680 = vmatpush2.bf16.msra.mxu0 0
        %681 = vmatprep.subr.bf16.mxu0 0
        %682 = vmatpush2.bf16.msra.mxu0 0
        %683 = vmatprep.subr.bf16.mxu0 0
        %684 = vmatpush2.bf16.msra.mxu0 0
        %685 = vmatprep.subr.bf16.mxu0 0
        %686 = vmatpush2.bf16.msra.mxu0 0
        %687 = vmatprep.subr.bf16.mxu0 0
        %688 = vmatpush2.bf16.msra.mxu0 0
        %689 = vmatprep.subr.bf16.mxu0 0
        %690 = vmatpush2.bf16.msra.mxu0 0
        %691 = vmatprep.mubr.bf16.mxu0 0
        %692 = vmatmul.mubr.bf16.gmra.mxu0 %v649
        %v693 = vpop.f32.mrf.mxu0
        %v694 = vadd.f32 0.0, %v693
        %v695 = vpop.f32.mrf.mxu0
        %v696 = vpop.f32.mrf.mxu0
        %v697 = vadd.f32 0.0, %v696
        %v698 = vpop.f32.mrf.mxu0
        %699 = vmatprep.mubr.bf16.mxu0 0
        %700 = vmatmul.mubr.bf16.gmra.mxu0 %v650
        %v701 = vpop.f32.mrf.mxu0
        %v702 = vadd.f32 0.0, %v701
        %v703 = vpop.f32.mrf.mxu0
        %v704 = vpop.f32.mrf.mxu0
        %v705 = vadd.f32 0.0, %v704
        %v706 = vpop.f32.mrf.mxu0
        %707 = vdwg.mxu0
        %v708 = vrcp.pop %v642
        %v709 = vmul.f32 %v694, %v708
        %v710 = vrcp.pop %v644
        %v711 = vmul.f32 %v697, %v710
        %v712 = vrcp.pop %v646
        %v713 = vmul.f32 %v702, %v712
        %v714 = vrcp.pop %v648
        %v715 = vmul.f32 %v705, %v714
        %716 = vst.msk [vmem:[%s345] sm:$0xff] %vm446, %v709
        %717 = vst.msk [vmem:[%s345 + $0x8] sm:$0xff] %vm446, %v711
        %718 = vst.msk [vmem:[%s345 + $0x10] sm:$0xff] %vm446, %v713
        %719 = vst.msk [vmem:[%s345 + $0x18] sm:$0xff] %vm446, %v715
        %s720 = sand.u32 %s161, 1
        %s721 = scalar_lea.sflag [#allocation4], %s720
        %s722 = sand.u32 %s161, 1
        %s723 = smul.addr %s722, 32
        %s724 = scalar_lea.vmem [#allocation3], %s723
        // Predicated region
        $region75: #{tpu_custom_call.1} parent=69 // pred_check
          %p725 = pneg %p171
        $region76: #{tpu_custom_call.1} parent=69 // pred_check_branch
          %727 = sbr.rel (%p725) target = $region78
        $region77: #{tpu_custom_call.1} parent=69 // pred_region
          %s728 = smul.u32 4, %s24
          %s730 = ssub.s32 512, 512
          %731 = vsyncadd %s721, %s730
          %s732 = smul.addr %s23, 4
          %s733 = sadd.s32 %s728, %s732
          %s734 = smul.addr %s733, 128
          %s735 = scalar_lea.hbm %s4, %s734
          %s736 = sshll.u32 %s724, 4
          %s737 = int_to_ptr.vmem [resolvable:$true] %s736
          %742 = dma.vmem_to_hbm [thread:$0]  %s737, 512, %s735, %s721, 128, 128, 8
        $region78: #{tpu_custom_call.1} parent=69 // pred_fallthru
          _
      $region70: #{tpu_custom_call.1} parent=5 // pred_fallthru
        _
      %p743 = scmp.le.s32.totalorder 2, %s13
      // Predicated region
      $region79: #{tpu_custom_call.1} parent=5 // pred_check
        %p744 = pneg %p743
      $region80: #{tpu_custom_call.1} parent=5 // pred_check_branch
        %746 = sbr.rel (%p744) target = $region82
      $region81: #{tpu_custom_call.1} parent=5 // pred_region
        %s747 = ssub.s32 %s13, 2
        // Predicated region
        $region83: #{tpu_custom_call.1} parent=81 // pred_check
          %p748 = pneg %p177
        $region84: #{tpu_custom_call.1} parent=81 // pred_check_branch
          %750 = sbr.rel (%p748) target = $region86
        $region85: #{tpu_custom_call.1} parent=81 // pred_region
          %s751 = sand.u32 %s162, 1
          %s752 = scalar_lea.sflag [#allocation4], %s751
          %s753 = sand.u32 %s162, 1
          %s754 = smul.addr %s753, 32
          %s755 = scalar_lea.vmem [#allocation3], %s754
          %756 = dma.done %s752, 512
        $region86: #{tpu_custom_call.1} parent=81 // pred_fallthru
          _
      $region82: #{tpu_custom_call.1} parent=5 // pred_fallthru
        _
    $region6: #{tpu_custom_call.1} parent=1 // loop_footer
      %s17 = sadd.s32 1, %s13
    $region7: #{tpu_custom_call.1} parent=1 // loop_footer_branch
      %12 = sbr.rel target = $region3
    $region8: #{tpu_custom_call.1} parent=1 // loop_exit
      _
    %757 = vsyncpa [#allocation4], 1
    %s758 = scalar_lea.sflag [#allocation4], 1
    %759 = vsyncpa %s758, 1

</llo_original>
